<compile_context>
chip_gen: v7x
topology: tpu7x:2x2x1
jax: 0.10.0
libtpu: 0.0.40
codegen_flags: <defaults>
</compile_context>

<pallas_src>
import functools

import jax
import jax.numpy as jnp
from jax.experimental import pallas as pl
from jax.experimental.pallas import tpu as pltpu


def _round_up(x, m):
    return (x + m - 1) // m * m


def _sage3_kernel(a_ref, h0_ref,
                  w1_ref, b1_ref, w2_ref, b2_ref, w3_ref, b3_ref,
                  u1_ref, u2_ref, o_ref, *, fpad: int, dropout_p: float):
    a = a_ref[...]                                    # [N, N] bf16, row-normalized
    inv_keep = 1.0 / (1.0 - dropout_p)

    def layer(h_f32, w_ref, b_ref, u_ref):
        # One MXU pass against the concatenated [Ws^T | Wn^T] weight (lane-dense 2*fpad).
        hw = jnp.dot(h_f32.astype(jnp.bfloat16), w_ref[...],
                     preferred_element_type=jnp.float32)          # [N, 2*fpad] f32
        hw_self = hw[:, :fpad]
        hw_neigh = hw[:, fpad:]
        # Mean aggregation AFTER projection: A @ (H @ Wn^T) -> O(N^2 * Fout) not O(N^2 * Fin).
        agg = jnp.dot(a, hw_neigh.astype(jnp.bfloat16),
                      preferred_element_type=jnp.float32)          # [N, fpad] f32
        out = hw_self + agg + b_ref[...]
        if u_ref is not None:                                      # hidden layers only
            out = jnp.maximum(out, 0.0)                            # ReLU
            keep = u_ref[...] >= dropout_p                         # P(keep) = 1 - p
            out = jnp.where(keep, out * inv_keep, 0.0)             # dropout, rescaled
        return out

    h = h0_ref[...].astype(jnp.float32)
    h = layer(h, w1_ref, b1_ref, u1_ref)
    h = layer(h, w2_ref, b2_ref, u2_ref)
    h = layer(h, w3_ref, b3_ref, None)          # last layer: no ReLU / dropout
    o_ref[...] = h.astype(o_ref.dtype)


def sage_forward(a_norm, x, params, *, dropout_key, dropout_p=0.5):
    """Fused 3-layer GraphSAGE forward. `params` is a list of (w_self, w_neigh, bias)."""
    assert len(params) == 3
    n, in_size = x.shape
    out_size = params[-1][0].shape[0]
    feat_sizes = [in_size] + [ws.shape[0] for (ws, _, _) in params]
    fpad = _round_up(max(feat_sizes), 128)           # lane-dense feature width
    npad = _round_up(n, 8)                           # sublane alignment

    # Node features, zero-padded to [npad, fpad].
    h0 = jnp.zeros((npad, fpad), jnp.float32).at[:n, :in_size].set(x)

    # Row-normalized adjacency, zero-padded, bf16 for the MXU / half HBM bytes.
    a_p = jnp.zeros((npad, npad), jnp.float32).at[:n, :n].set(a_norm).astype(jnp.bfloat16)

    # Per-layer concatenated weights [Ws^T | Wn^T] padded to [fpad, 2*fpad] (bf16) + bias.
    w_cat, biases = [], []
    for (ws, wn, b) in params:
        fout, fin = ws.shape
        w = jnp.zeros((fpad, 2 * fpad), jnp.float32)
        w = w.at[:fin, :fout].set(ws.T)
        w = w.at[:fin, fpad:fpad + fout].set(wn.T)
        w_cat.append(w.astype(jnp.bfloat16))
        biases.append(jnp.zeros((1, fpad), jnp.float32).at[0, :fout].set(b))

    # Host-side dropout uniforms for the two hidden layers (padded cols are zero anyway).
    k1, k2 = jax.random.split(dropout_key)
    u1 = jax.random.uniform(k1, (npad, fpad), jnp.float32)
    u2 = jax.random.uniform(k2, (npad, fpad), jnp.float32)

    kernel = functools.partial(_sage3_kernel, fpad=fpad, dropout_p=dropout_p)
    vmem = pl.BlockSpec(memory_space=pltpu.MemorySpace.VMEM)

    flops = 3 * (2 * npad * fpad * (2 * fpad)) + 3 * (2 * npad * npad * fpad)
    bytes_accessed = (a_p.size * 2 + h0.size * 4
                      + sum(w.size * 2 for w in w_cat)
                      + sum(b.size * 4 for b in biases)
                      + (u1.size + u2.size) * 4
                      + npad * fpad * 4)

    out = pl.pallas_call(
        kernel,
        out_shape=jax.ShapeDtypeStruct((npad, fpad), jnp.float32),
        in_specs=[vmem] * 10,
        out_specs=vmem,
        cost_estimate=pl.CostEstimate(flops=flops, transcendentals=0,
                                      bytes_accessed=bytes_accessed),
    )(a_p, h0,
      w_cat[0], biases[0], w_cat[1], biases[1], w_cat[2], biases[2],
      u1, u2)

    return out[:n, :out_size]


def init_params(key, in_size, hid_size, out_size):
    sizes = [(in_size, hid_size), (hid_size, hid_size), (hid_size, out_size)]
    params = []
    for (fin, fout) in sizes:
        key, k1, k2 = jax.random.split(key, 3)
        scale = 1.0 / jnp.sqrt(jnp.float32(fin))
        w_self = jax.random.uniform(k1, (fout, fin), jnp.float32, -scale, scale)
        w_neigh = jax.random.uniform(k2, (fout, fin), jnp.float32, -scale, scale)
        bias = jnp.zeros((fout,), jnp.float32)
        params.append((w_self, w_neigh, bias))
    return params


if __name__ == "__main__":
    N, IN, HID, OUT = 64, 32, 32, 16

    key = jax.random.PRNGKey(0)
    k_feat, k_adj, k_param, k_drop = jax.random.split(key, 4)

    # node features [N, IN]
    x = jax.random.normal(k_feat, (N, IN), jnp.float32)

    # random directed graph, then row-normalize (mean aggregation)
    adj = (jax.random.uniform(k_adj, (N, N)) < 0.3).astype(jnp.float32)
    adj = adj * (1.0 - jnp.eye(N, dtype=jnp.float32))        # no self loops
    deg = jnp.maximum(adj.sum(axis=1, keepdims=True), 1.0)   # avoid div-by-zero
    a_norm = adj / deg

    params = init_params(k_param, IN, HID, OUT)

    out = sage_forward(a_norm, x, params, dropout_key=k_drop)
    out = jax.block_until_ready(out)
    assert out.shape == (N, OUT) and out.dtype == jnp.float32
    print("KERNEL_OK")
</pallas_src>

<mosaic_0001>
module attributes {stable_mosaic.version = 11 : i64} {
  func.func @_sage3_kernel(%arg0: memref<64x64xbf16, #tpu.memory_space<vmem>>, %arg1: memref<64x128xf32, #tpu.memory_space<vmem>>, %arg2: memref<128x256xbf16, #tpu.memory_space<vmem>>, %arg3: memref<1x128xf32, #tpu.memory_space<vmem>>, %arg4: memref<128x256xbf16, #tpu.memory_space<vmem>>, %arg5: memref<1x128xf32, #tpu.memory_space<vmem>>, %arg6: memref<128x256xbf16, #tpu.memory_space<vmem>>, %arg7: memref<1x128xf32, #tpu.memory_space<vmem>>, %arg8: memref<64x128xf32, #tpu.memory_space<vmem>>, %arg9: memref<64x128xf32, #tpu.memory_space<vmem>>, %arg10: memref<64x128xf32, #tpu.memory_space<vmem>>) attributes {dimension_semantics = [], scalar_prefetch = 0 : i64, scratch_operands = 0 : i64, tpu.core_type = #tpu.core_type<tc>} {
    %c0 = arith.constant 0 : index
    %c0_0 = arith.constant 0 : index
    %0 = vector.load %arg0[%c0, %c0_0] : memref<64x64xbf16, #tpu.memory_space<vmem>>, vector<64x64xbf16>
    %c0_1 = arith.constant 0 : index
    %c0_2 = arith.constant 0 : index
    %1 = vector.load %arg1[%c0_1, %c0_2] : memref<64x128xf32, #tpu.memory_space<vmem>>, vector<64x128xf32>
    %2 = arith.truncf %1 : vector<64x128xf32> to vector<64x128xbf16>
    %c0_3 = arith.constant 0 : index
    %c0_4 = arith.constant 0 : index
    %3 = vector.load %arg2[%c0_3, %c0_4] : memref<128x256xbf16, #tpu.memory_space<vmem>>, vector<128x256xbf16>
    %cst = arith.constant dense<0.000000e+00> : vector<64x256xf32>
    %4 = tpu.matmul %2, %3, %cst {dimension_numbers = #tpu.dot_dimension_numbers<[1], [0], [0], [1], [0, 0, 1, 1], [], []>} : vector<64x128xbf16>, vector<128x256xbf16>, vector<64x256xf32> -> vector<64x256xf32>
    %5 = vector.extract_strided_slice %4 {offsets = [0, 0], sizes = [64, 128], strides = [1, 1]} : vector<64x256xf32> to vector<64x128xf32>
    %6 = vector.extract_strided_slice %4 {offsets = [0, 128], sizes = [64, 128], strides = [1, 1]} : vector<64x256xf32> to vector<64x128xf32>
    %7 = arith.truncf %6 : vector<64x128xf32> to vector<64x128xbf16>
    %cst_5 = arith.constant dense<0.000000e+00> : vector<64x128xf32>
    %8 = tpu.matmul %0, %7, %cst_5 {dimension_numbers = #tpu.dot_dimension_numbers<[1], [0], [0], [1], [0, 0, 1, 1], [], []>} : vector<64x64xbf16>, vector<64x128xbf16>, vector<64x128xf32> -> vector<64x128xf32>
    %9 = arith.addf %5, %8 : vector<64x128xf32>
    %c0_6 = arith.constant 0 : index
    %c0_7 = arith.constant 0 : index
    %10 = vector.load %arg3[%c0_6, %c0_7] : memref<1x128xf32, #tpu.memory_space<vmem>>, vector<1x128xf32>
    %11 = vector.broadcast %10 : vector<1x128xf32> to vector<64x128xf32>
    %12 = arith.addf %9, %11 : vector<64x128xf32>
    %cst_8 = arith.constant 0.000000e+00 : f32
    %13 = vector.broadcast %cst_8 : f32 to vector<64x128xf32>
    %14 = arith.maximumf %12, %13 : vector<64x128xf32>
    %c0_9 = arith.constant 0 : index
    %c0_10 = arith.constant 0 : index
    %15 = vector.load %arg8[%c0_9, %c0_10] : memref<64x128xf32, #tpu.memory_space<vmem>>, vector<64x128xf32>
    %cst_11 = arith.constant 5.000000e-01 : f32
    %16 = vector.broadcast %cst_11 : f32 to vector<64x128xf32>
    %17 = arith.cmpf oge, %15, %16 : vector<64x128xf32>
    %cst_12 = arith.constant 2.000000e+00 : f32
    %18 = vector.broadcast %cst_12 : f32 to vector<64x128xf32>
    %19 = arith.mulf %14, %18 : vector<64x128xf32>
    %cst_13 = arith.constant 0.000000e+00 : f32
    %20 = vector.broadcast %cst_13 : f32 to vector<64x128xf32>
    %21 = arith.select %17, %19, %20 : vector<64x128xi1>, vector<64x128xf32>
    %22 = arith.truncf %21 : vector<64x128xf32> to vector<64x128xbf16>
    %c0_14 = arith.constant 0 : index
    %c0_15 = arith.constant 0 : index
    %23 = vector.load %arg4[%c0_14, %c0_15] : memref<128x256xbf16, #tpu.memory_space<vmem>>, vector<128x256xbf16>
    %cst_16 = arith.constant dense<0.000000e+00> : vector<64x256xf32>
    %24 = tpu.matmul %22, %23, %cst_16 {dimension_numbers = #tpu.dot_dimension_numbers<[1], [0], [0], [1], [0, 0, 1, 1], [], []>} : vector<64x128xbf16>, vector<128x256xbf16>, vector<64x256xf32> -> vector<64x256xf32>
    %25 = vector.extract_strided_slice %24 {offsets = [0, 0], sizes = [64, 128], strides = [1, 1]} : vector<64x256xf32> to vector<64x128xf32>
    %26 = vector.extract_strided_slice %24 {offsets = [0, 128], sizes = [64, 128], strides = [1, 1]} : vector<64x256xf32> to vector<64x128xf32>
    %27 = arith.truncf %26 : vector<64x128xf32> to vector<64x128xbf16>
    %cst_17 = arith.constant dense<0.000000e+00> : vector<64x128xf32>
    %28 = tpu.matmul %0, %27, %cst_17 {dimension_numbers = #tpu.dot_dimension_numbers<[1], [0], [0], [1], [0, 0, 1, 1], [], []>} : vector<64x64xbf16>, vector<64x128xbf16>, vector<64x128xf32> -> vector<64x128xf32>
    %29 = arith.addf %25, %28 : vector<64x128xf32>
    %c0_18 = arith.constant 0 : index
    %c0_19 = arith.constant 0 : index
    %30 = vector.load %arg5[%c0_18, %c0_19] : memref<1x128xf32, #tpu.memory_space<vmem>>, vector<1x128xf32>
    %31 = vector.broadcast %30 : vector<1x128xf32> to vector<64x128xf32>
    %32 = arith.addf %29, %31 : vector<64x128xf32>
    %cst_20 = arith.constant 0.000000e+00 : f32
    %33 = vector.broadcast %cst_20 : f32 to vector<64x128xf32>
    %34 = arith.maximumf %32, %33 : vector<64x128xf32>
    %c0_21 = arith.constant 0 : index
    %c0_22 = arith.constant 0 : index
    %35 = vector.load %arg9[%c0_21, %c0_22] : memref<64x128xf32, #tpu.memory_space<vmem>>, vector<64x128xf32>
    %cst_23 = arith.constant 5.000000e-01 : f32
    %36 = vector.broadcast %cst_23 : f32 to vector<64x128xf32>
    %37 = arith.cmpf oge, %35, %36 : vector<64x128xf32>
    %cst_24 = arith.constant 2.000000e+00 : f32
    %38 = vector.broadcast %cst_24 : f32 to vector<64x128xf32>
    %39 = arith.mulf %34, %38 : vector<64x128xf32>
    %cst_25 = arith.constant 0.000000e+00 : f32
    %40 = vector.broadcast %cst_25 : f32 to vector<64x128xf32>
    %41 = arith.select %37, %39, %40 : vector<64x128xi1>, vector<64x128xf32>
    %42 = arith.truncf %41 : vector<64x128xf32> to vector<64x128xbf16>
    %c0_26 = arith.constant 0 : index
    %c0_27 = arith.constant 0 : index
    %43 = vector.load %arg6[%c0_26, %c0_27] : memref<128x256xbf16, #tpu.memory_space<vmem>>, vector<128x256xbf16>
    %cst_28 = arith.constant dense<0.000000e+00> : vector<64x256xf32>
    %44 = tpu.matmul %42, %43, %cst_28 {dimension_numbers = #tpu.dot_dimension_numbers<[1], [0], [0], [1], [0, 0, 1, 1], [], []>} : vector<64x128xbf16>, vector<128x256xbf16>, vector<64x256xf32> -> vector<64x256xf32>
    %45 = vector.extract_strided_slice %44 {offsets = [0, 0], sizes = [64, 128], strides = [1, 1]} : vector<64x256xf32> to vector<64x128xf32>
    %46 = vector.extract_strided_slice %44 {offsets = [0, 128], sizes = [64, 128], strides = [1, 1]} : vector<64x256xf32> to vector<64x128xf32>
    %47 = arith.truncf %46 : vector<64x128xf32> to vector<64x128xbf16>
    %cst_29 = arith.constant dense<0.000000e+00> : vector<64x128xf32>
    %48 = tpu.matmul %0, %47, %cst_29 {dimension_numbers = #tpu.dot_dimension_numbers<[1], [0], [0], [1], [0, 0, 1, 1], [], []>} : vector<64x64xbf16>, vector<64x128xbf16>, vector<64x128xf32> -> vector<64x128xf32>
    %49 = arith.addf %45, %48 : vector<64x128xf32>
    %c0_30 = arith.constant 0 : index
    %c0_31 = arith.constant 0 : index
    %50 = vector.load %arg7[%c0_30, %c0_31] : memref<1x128xf32, #tpu.memory_space<vmem>>, vector<1x128xf32>
    %51 = vector.broadcast %50 : vector<1x128xf32> to vector<64x128xf32>
    %52 = arith.addf %49, %51 : vector<64x128xf32>
    %c0_32 = arith.constant 0 : index
    %c0_33 = arith.constant 0 : index
    %53 = vector.load %arg10[%c0_32, %c0_33] : memref<64x128xf32, #tpu.memory_space<vmem>>, vector<64x128xf32>
    tpu.vector_store %arg10[%c0_32, %c0_33], %52 {strides = array<i32>} : memref<64x128xf32, #tpu.memory_space<vmem>>, vector<64x128xf32>,
    return
  }
}

</mosaic_0001>

<llo_original>
// kernel: tpu_custom_call.1
$region0: #{tpu_custom_call.1}
  #allocation0 [shape = 'u32[]', space=smem, size = 0x4, offset = 0x4, fixed_abs, tag = 'smem constant byte address 0x4 - core index']
  #allocation1 [shape = 'u32[144,128]{1,0:T(1,128)}', space=vmem, size = 0x12000, scoped, tag = 'internal scratch']
  %s0 = inlined_call_operand.hbm [shape: bf16[64,64], index: 0, kind: input, shape index: {}]
  %s1 = inlined_call_operand.hbm [shape: f32[64,128], index: 1, kind: input, shape index: {}]
  %s2 = inlined_call_operand.hbm [shape: bf16[128,256], index: 2, kind: input, shape index: {}]
  %s3 = inlined_call_operand.vmem [shape: f32[1,128], index: 3, kind: input, shape index: {}]
  %s4 = inlined_call_operand.hbm [shape: bf16[128,256], index: 4, kind: input, shape index: {}]
  %s5 = inlined_call_operand.vmem [shape: f32[1,128], index: 5, kind: input, shape index: {}]
  %s6 = inlined_call_operand.hbm [shape: bf16[128,256], index: 6, kind: input, shape index: {}]
  %s7 = inlined_call_operand.vmem [shape: f32[1,128], index: 7, kind: input, shape index: {}]
  %s8 = inlined_call_operand.hbm [shape: f32[64,128], index: 8, kind: input, shape index: {}]
  %s9 = inlined_call_operand.hbm [shape: f32[64,128], index: 9, kind: input, shape index: {}]
  %s10 = inlined_call_operand.hbm [shape: f32[64,128], index: 10, kind: output, shape index: {}]
  %s11 = sld [smem:[#allocation0]]
  $region78: #{tpu_custom_call.1} parent=0
    _
  %s13 = ssub.s32 1, %s11
  %s14 = scalar_select 0, %s13, %s11
  $region1: #{tpu_custom_call.1} parent=0
    #allocation2 [shape = 'u8[16384]{0}', space=vmem, size = 0x4000, scoped, tag = 'input window, operand 0, single buffered']
    #allocation3 [shape = 's32[1]{0}', space=sflag, size = 0x4, scoped, tag = 'scoped memory for tpu_custom_call.1']
    #allocation4 [shape = 's32[1]{0}', space=sflag, size = 0x4, scoped, tag = 'scoped memory for tpu_custom_call.1']
    #allocation5 [shape = 'u8[32768]{0}', space=vmem, size = 0x8000, scoped, tag = 'input window, operand 1, single buffered']
    #allocation6 [shape = 's32[1]{0}', space=sflag, size = 0x4, scoped, tag = 'scoped memory for tpu_custom_call.1']
    #allocation7 [shape = 'u8[65536]{0}', space=vmem, size = 0x10000, scoped, tag = 'input window, operand 2, single buffered']
    #allocation8 [shape = 'u8[65536]{0}', space=vmem, size = 0x10000, scoped, tag = 'input window, operand 4, single buffered']
    #allocation9 [shape = 's32[1]{0}', space=sflag, size = 0x4, scoped, tag = 'scoped memory for tpu_custom_call.1']
    #allocation10 [shape = 'u8[65536]{0}', space=vmem, size = 0x10000, scoped, tag = 'input window, operand 6, single buffered']
    #allocation11 [shape = 'u8[32768]{0}', space=vmem, size = 0x8000, scoped, tag = 'input window, operand 8, single buffered']
    #allocation12 [shape = 's32[1]{0}', space=sflag, size = 0x4, scoped, tag = 'scoped memory for tpu_custom_call.1']
    #allocation13 [shape = 'u8[32768]{0}', space=vmem, size = 0x8000, scoped, tag = 'input window, operand 9, single buffered']
    #allocation14 [shape = 'u8[32768]{0}', space=vmem, size = 0x8000, scoped, tag = 'output window, operand 0, single buffered']
    %15 = vsyncpa [#allocation3], 0
    %16 = vsyncpa [#allocation6], 0
    %17 = vsyncpa [#allocation9], 0
    %18 = vsyncpa [#allocation12], 0
    %19 = vsyncpa [#allocation4], 0
    // Predicated region
    $region2: #{tpu_custom_call.1} parent=1 // pred_check
      _
    $region3: #{tpu_custom_call.1} parent=1 // pred_check_branch
      %21 = sbr.rel (0) target = $region5
    $region4: #{tpu_custom_call.1} parent=1 // pred_region
      %s23 = ssub.s32 512, 512
      %24 = vsyncadd [#allocation3], %s23
      %s25 = sshll.u32 [#allocation2], 4
      %s26 = int_to_ptr.vmem [resolvable:$true] %s25
      %31 = dma.hbm_to_vmem [thread:$0]  %s0, 512, %s26, [#allocation3], 64, 64, 4
    $region5: #{tpu_custom_call.1} parent=1 // pred_fallthru
      _
    // Predicated region
    $region6: #{tpu_custom_call.1} parent=1 // pred_check
      _
    $region7: #{tpu_custom_call.1} parent=1 // pred_check_branch
      %33 = sbr.rel (0) target = $region9
    $region8: #{tpu_custom_call.1} parent=1 // pred_region
      %s35 = ssub.s32 1024, 1024
      %36 = vsyncadd [#allocation6], %s35
      %s37 = sshll.u32 [#allocation5], 4
      %s38 = int_to_ptr.vmem [resolvable:$true] %s37
      %43 = dma.hbm_to_vmem [thread:$0]  %s1, 1024, %s38, [#allocation6], 128, 128, 8
    $region9: #{tpu_custom_call.1} parent=1 // pred_fallthru
      _
    // Predicated region
    $region10: #{tpu_custom_call.1} parent=1 // pred_check
      _
    $region11: #{tpu_custom_call.1} parent=1 // pred_check_branch
      %45 = sbr.rel (0) target = $region13
    $region12: #{tpu_custom_call.1} parent=1 // pred_region
      %s47 = ssub.s32 2048, 2048
      %48 = vsyncadd [#allocation6], %s47
      %s49 = sshll.u32 [#allocation7], 4
      %s50 = int_to_ptr.vmem [resolvable:$true] %s49
      %55 = dma.hbm_to_vmem [thread:$0]  %s2, 2048, %s50, [#allocation6], 128, 128, 8
    $region13: #{tpu_custom_call.1} parent=1 // pred_fallthru
      _
    // Predicated region
    $region14: #{tpu_custom_call.1} parent=1 // pred_check
      _
    $region15: #{tpu_custom_call.1} parent=1 // pred_check_branch
      %57 = sbr.rel (0) target = $region17
    $region16: #{tpu_custom_call.1} parent=1 // pred_region
      _
    $region17: #{tpu_custom_call.1} parent=1 // pred_fallthru
      _
    // Predicated region
    $region18: #{tpu_custom_call.1} parent=1 // pred_check
      _
    $region19: #{tpu_custom_call.1} parent=1 // pred_check_branch
      %59 = sbr.rel (0) target = $region21
    $region20: #{tpu_custom_call.1} parent=1 // pred_region
      %s61 = ssub.s32 2048, 2048
      %62 = vsyncadd [#allocation9], %s61
      %s63 = sshll.u32 [#allocation8], 4
      %s64 = int_to_ptr.vmem [resolvable:$true] %s63
      %69 = dma.hbm_to_vmem [thread:$0]  %s4, 2048, %s64, [#allocation9], 128, 128, 8
    $region21: #{tpu_custom_call.1} parent=1 // pred_fallthru
      _
    // Predicated region
    $region22: #{tpu_custom_call.1} parent=1 // pred_check
      _
    $region23: #{tpu_custom_call.1} parent=1 // pred_check_branch
      %71 = sbr.rel (0) target = $region25
    $region24: #{tpu_custom_call.1} parent=1 // pred_region
      _
    $region25: #{tpu_custom_call.1} parent=1 // pred_fallthru
      _
    // Predicated region
    $region26: #{tpu_custom_call.1} parent=1 // pred_check
      _
    $region27: #{tpu_custom_call.1} parent=1 // pred_check_branch
      %73 = sbr.rel (0) target = $region29
    $region28: #{tpu_custom_call.1} parent=1 // pred_region
      %s75 = ssub.s32 2048, 2048
      %76 = vsyncadd [#allocation9], %s75
      %s77 = sshll.u32 [#allocation10], 4
      %s78 = int_to_ptr.vmem [resolvable:$true] %s77
      %83 = dma.hbm_to_vmem [thread:$0]  %s6, 2048, %s78, [#allocation9], 128, 128, 8
    $region29: #{tpu_custom_call.1} parent=1 // pred_fallthru
      _
    // Predicated region
    $region30: #{tpu_custom_call.1} parent=1 // pred_check
      _
    $region31: #{tpu_custom_call.1} parent=1 // pred_check_branch
      %85 = sbr.rel (0) target = $region33
    $region32: #{tpu_custom_call.1} parent=1 // pred_region
      _
    $region33: #{tpu_custom_call.1} parent=1 // pred_fallthru
      _
    // Predicated region
    $region34: #{tpu_custom_call.1} parent=1 // pred_check
      _
    $region35: #{tpu_custom_call.1} parent=1 // pred_check_branch
      %87 = sbr.rel (0) target = $region37
    $region36: #{tpu_custom_call.1} parent=1 // pred_region
      %s89 = ssub.s32 1024, 1024
      %90 = vsyncadd [#allocation12], %s89
      %s91 = sshll.u32 [#allocation11], 4
      %s92 = int_to_ptr.vmem [resolvable:$true] %s91
      %97 = dma.hbm_to_vmem [thread:$0]  %s8, 1024, %s92, [#allocation12], 128, 128, 8
    $region37: #{tpu_custom_call.1} parent=1 // pred_fallthru
      _
    // Predicated region
    $region38: #{tpu_custom_call.1} parent=1 // pred_check
      _
    $region39: #{tpu_custom_call.1} parent=1 // pred_check_branch
      %99 = sbr.rel (0) target = $region41
    $region40: #{tpu_custom_call.1} parent=1 // pred_region
      %s101 = ssub.s32 1024, 1024
      %102 = vsyncadd [#allocation12], %s101
      %s103 = sshll.u32 [#allocation13], 4
      %s104 = int_to_ptr.vmem [resolvable:$true] %s103
      %109 = dma.hbm_to_vmem [thread:$0]  %s9, 1024, %s104, [#allocation12], 128, 128, 8
    $region41: #{tpu_custom_call.1} parent=1 // pred_fallthru
      _
    // Predicated region
    $region42: #{tpu_custom_call.1} parent=1 // pred_check
      _
    $region43: #{tpu_custom_call.1} parent=1 // pred_check_branch
      %111 = sbr.rel (0) target = $region45
    $region44: #{tpu_custom_call.1} parent=1 // pred_region
      %112 = dma.done [#allocation3], 512
    $region45: #{tpu_custom_call.1} parent=1 // pred_fallthru
      _
    // Predicated region
    $region46: #{tpu_custom_call.1} parent=1 // pred_check
      _
    $region47: #{tpu_custom_call.1} parent=1 // pred_check_branch
      %114 = sbr.rel (0) target = $region49
    $region48: #{tpu_custom_call.1} parent=1 // pred_region
      %115 = dma.done [#allocation6], 1024
    $region49: #{tpu_custom_call.1} parent=1 // pred_fallthru
      _
    // Predicated region
    $region50: #{tpu_custom_call.1} parent=1 // pred_check
      _
    $region51: #{tpu_custom_call.1} parent=1 // pred_check_branch
      %117 = sbr.rel (0) target = $region53
    $region52: #{tpu_custom_call.1} parent=1 // pred_region
      %118 = dma.done [#allocation6], 2048
    $region53: #{tpu_custom_call.1} parent=1 // pred_fallthru
      _
    // Predicated region
    $region54: #{tpu_custom_call.1} parent=1 // pred_check
      _
    $region55: #{tpu_custom_call.1} parent=1 // pred_check_branch
      %120 = sbr.rel (0) target = $region57
    $region56: #{tpu_custom_call.1} parent=1 // pred_region
      %121 = dma.done [#allocation9], 2048
    $region57: #{tpu_custom_call.1} parent=1 // pred_fallthru
      _
    // Predicated region
    $region58: #{tpu_custom_call.1} parent=1 // pred_check
      _
    $region59: #{tpu_custom_call.1} parent=1 // pred_check_branch
      %123 = sbr.rel (0) target = $region61
    $region60: #{tpu_custom_call.1} parent=1 // pred_region
      %124 = dma.done [#allocation9], 2048
    $region61: #{tpu_custom_call.1} parent=1 // pred_fallthru
      _
    // Predicated region
    $region62: #{tpu_custom_call.1} parent=1 // pred_check
      _
    $region63: #{tpu_custom_call.1} parent=1 // pred_check_branch
      %126 = sbr.rel (0) target = $region65
    $region64: #{tpu_custom_call.1} parent=1 // pred_region
      %127 = dma.done [#allocation12], 1024
    $region65: #{tpu_custom_call.1} parent=1 // pred_fallthru
      _
    // Predicated region
    $region66: #{tpu_custom_call.1} parent=1 // pred_check
      _
    $region67: #{tpu_custom_call.1} parent=1 // pred_check_branch
      %129 = sbr.rel (0) target = $region69
    $region68: #{tpu_custom_call.1} parent=1 // pred_region
      %130 = dma.done [#allocation12], 1024
    $region69: #{tpu_custom_call.1} parent=1 // pred_fallthru
      _
    %v132 = vld [vmem:[#allocation2] sm:$0xf]
    %v133 = vld [vmem:[#allocation2 + $0x4] sm:$0xf]
    %v134 = vld [vmem:[#allocation2 + $0x8] sm:$0xf]
    %v135 = vld [vmem:[#allocation2 + $0xc] sm:$0xf]
    %v136 = vld [vmem:[#allocation2 + $0x10] sm:$0xf]
    %v137 = vld [vmem:[#allocation2 + $0x14] sm:$0xf]
    %v138 = vld [vmem:[#allocation2 + $0x18] sm:$0xf]
    %v139 = vld [vmem:[#allocation2 + $0x1c] sm:$0xf]
    %v140 = vld [vmem:[#allocation5] sm:$0xff]
    %v141 = vld [vmem:[#allocation5 + $0x8] sm:$0xff]
    %v142 = vld [vmem:[#allocation5 + $0x10] sm:$0xff]
    %v143 = vld [vmem:[#allocation5 + $0x18] sm:$0xff]
    %v144 = vld [vmem:[#allocation5 + $0x20] sm:$0xff]
    %v145 = vld [vmem:[#allocation5 + $0x28] sm:$0xff]
    %v146 = vld [vmem:[#allocation5 + $0x30] sm:$0xff]
    %v147 = vld [vmem:[#allocation5 + $0x38] sm:$0xff]
    %v148 = vpack.c.bf16 %v141, %v140
    %v149 = vpack.c.bf16 %v143, %v142
    %v150 = vpack.c.bf16 %v145, %v144
    %v151 = vpack.c.bf16 %v147, %v146
    %v152 = vld [vmem:[#allocation7] sm:$0xff]
    %v153 = vld [vmem:[#allocation7 + $0x8] sm:$0xff]
    %v154 = vld [vmem:[#allocation7 + $0x10] sm:$0xff]
    %v155 = vld [vmem:[#allocation7 + $0x18] sm:$0xff]
    %v156 = vld [vmem:[#allocation7 + $0x20] sm:$0xff]
    %v157 = vld [vmem:[#allocation7 + $0x28] sm:$0xff]
    %v158 = vld [vmem:[#allocation7 + $0x30] sm:$0xff]
    %v159 = vld [vmem:[#allocation7 + $0x38] sm:$0xff]
    %v160 = vld [vmem:[#allocation7 + $0x40] sm:$0xff]
    %v161 = vld [vmem:[#allocation7 + $0x48] sm:$0xff]
    %v162 = vld [vmem:[#allocation7 + $0x50] sm:$0xff]
    %v163 = vld [vmem:[#allocation7 + $0x58] sm:$0xff]
    %v164 = vld [vmem:[#allocation7 + $0x60] sm:$0xff]
    %v165 = vld [vmem:[#allocation7 + $0x68] sm:$0xff]
    %v166 = vld [vmem:[#allocation7 + $0x70] sm:$0xff]
    %v167 = vld [vmem:[#allocation7 + $0x78] sm:$0xff]
    %v184 = vunpack.c.l.b16 %v152
    %v185 = vunpack.c.h.b16 %v152
    %v186 = vunpack.c.l.b16 %v153
    %v187 = vunpack.c.h.b16 %v153
    %v188 = vunpack.c.l.b16 %v154
    %v189 = vunpack.c.h.b16 %v154
    %v190 = vunpack.c.l.b16 %v155
    %v191 = vunpack.c.h.b16 %v155
    %v192 = vunpack.c.l.b16 %v156
    %v193 = vunpack.c.h.b16 %v156
    %v194 = vunpack.c.l.b16 %v157
    %v195 = vunpack.c.h.b16 %v157
    %v196 = vunpack.c.l.b16 %v158
    %v197 = vunpack.c.h.b16 %v158
    %v198 = vunpack.c.l.b16 %v159
    %v199 = vunpack.c.h.b16 %v159
    %v200 = vunpack.c.l.b16 %v160
    %v201 = vunpack.c.h.b16 %v160
    %v202 = vunpack.c.l.b16 %v161
    %v203 = vunpack.c.h.b16 %v161
    %v204 = vunpack.c.l.b16 %v162
    %v205 = vunpack.c.h.b16 %v162
    %v206 = vunpack.c.l.b16 %v163
    %v207 = vunpack.c.h.b16 %v163
    %v208 = vunpack.c.l.b16 %v164
    %v209 = vunpack.c.h.b16 %v164
    %v210 = vunpack.c.l.b16 %v165
    %v211 = vunpack.c.h.b16 %v165
    %v212 = vunpack.c.l.b16 %v166
    %v213 = vunpack.c.h.b16 %v166
    %v214 = vunpack.c.l.b16 %v167
    %v215 = vunpack.c.h.b16 %v167
    %v216 = vpack.c.b16 %v186, %v184
    %v217 = vpack.c.b16 %v187, %v185
    %v218 = vpack.c.b16 %v190, %v188
    %v219 = vpack.c.b16 %v191, %v189
    %v220 = vpack.c.b16 %v194, %v192
    %v221 = vpack.c.b16 %v195, %v193
    %v222 = vpack.c.b16 %v198, %v196
    %v223 = vpack.c.b16 %v199, %v197
    %v224 = vpack.c.b16 %v202, %v200
    %v225 = vpack.c.b16 %v203, %v201
    %v226 = vpack.c.b16 %v206, %v204
    %v227 = vpack.c.b16 %v207, %v205
    %v228 = vpack.c.b16 %v210, %v208
    %v229 = vpack.c.b16 %v211, %v209
    %v230 = vpack.c.b16 %v214, %v212
    %v231 = vpack.c.b16 %v215, %v213
    %248 = vmatprep.subr.bf16.mxu0 %v217
    %249 = vmatpush1.bf16.msra.mxu0 %v216
    %250 = vmatprep.subr.bf16.mxu0 %v219
    %251 = vmatpush1.bf16.msra.mxu0 %v218
    %252 = vmatprep.subr.bf16.mxu0 %v221
    %253 = vmatpush1.bf16.msra.mxu0 %v220
    %254 = vmatprep.subr.bf16.mxu0 %v223
    %255 = vmatpush1.bf16.msra.mxu0 %v222
    %256 = vmatprep.subr.bf16.mxu0 %v225
    %257 = vmatpush1.bf16.msra.mxu0 %v224
    %258 = vmatprep.subr.bf16.mxu0 %v227
    %259 = vmatpush1.bf16.msra.mxu0 %v226
    %260 = vmatprep.subr.bf16.mxu0 %v229
    %261 = vmatpush1.bf16.msra.mxu0 %v228
    %262 = vmatprep.subr.bf16.mxu0 %v231
    %263 = vmatpush1.bf16.msra.mxu0 %v230
    %264 = vmatprep.subr.bf16.mxu0 0
    %265 = vmatpush1.bf16.msra.mxu0 0
    %266 = vmatprep.subr.bf16.mxu0 0
    %267 = vmatpush1.bf16.msra.mxu0 0
    %268 = vmatprep.subr.bf16.mxu0 0
    %269 = vmatpush1.bf16.msra.mxu0 0
    %270 = vmatprep.subr.bf16.mxu0 0
    %271 = vmatpush1.bf16.msra.mxu0 0
    %272 = vmatprep.subr.bf16.mxu0 0
    %273 = vmatpush1.bf16.msra.mxu0 0
    %274 = vmatprep.subr.bf16.mxu0 0
    %275 = vmatpush1.bf16.msra.mxu0 0
    %276 = vmatprep.subr.bf16.mxu0 0
    %277 = vmatpush1.bf16.msra.mxu0 0
    %278 = vmatprep.subr.bf16.mxu0 0
    %279 = vmatpush1.bf16.msra.mxu0 0
    %280 = vmatprep.mubr.bf16.mxu0 0
    %281 = vmatmul.mubr.bf16.gmra.mrb[0].mxu0 %v148
    %v282 = vpop.f32.mrb[0].mxu0
    %v283 = vadd.f32 0.0, %v282
    %v284 = vpop.f32.mrb[0].mxu0
    %v285 = vadd.f32 0.0, %v284
    %v286 = vpop.f32.mrb[0].mxu0
    %v287 = vadd.f32 0.0, %v286
    %v288 = vpop.f32.mrb[0].mxu0
    %v289 = vadd.f32 0.0, %v288
    %290 = vmatprep.mubr.bf16.mxu0 0
    %291 = vmatmul.mubr.bf16.gmra.mrb[0].mxu0 %v149
    %v292 = vpop.f32.mrb[0].mxu0
    %v293 = vadd.f32 0.0, %v292
    %v294 = vpop.f32.mrb[0].mxu0
    %v295 = vadd.f32 0.0, %v294
    %v296 = vpop.f32.mrb[0].mxu0
    %v297 = vadd.f32 0.0, %v296
    %v298 = vpop.f32.mrb[0].mxu0
    %v299 = vadd.f32 0.0, %v298
    %300 = vmatprep.mubr.bf16.mxu0 0
    %301 = vmatmul.mubr.bf16.gmra.mrb[0].mxu0 %v150
    %v302 = vpop.f32.mrb[0].mxu0
    %v303 = vadd.f32 0.0, %v302
    %v304 = vpop.f32.mrb[0].mxu0
    %v305 = vadd.f32 0.0, %v304
    %v306 = vpop.f32.mrb[0].mxu0
    %v307 = vadd.f32 0.0, %v306
    %v308 = vpop.f32.mrb[0].mxu0
    %v309 = vadd.f32 0.0, %v308
    %310 = vmatprep.mubr.bf16.mxu0 0
    %311 = vmatmul.mubr.bf16.gmra.mrb[0].mxu0 %v151
    %v312 = vpop.f32.mrb[0].mxu0
    %v313 = vadd.f32 0.0, %v312
    %v314 = vpop.f32.mrb[0].mxu0
    %v315 = vadd.f32 0.0, %v314
    %v316 = vpop.f32.mrb[0].mxu0
    %v317 = vadd.f32 0.0, %v316
    %v318 = vpop.f32.mrb[0].mxu0
    %v319 = vadd.f32 0.0, %v318
    %320 = vdwg.mxu0
    %v321 = vpack.c.bf16 %v289, %v285
    %v322 = vpack.c.bf16 %v299, %v295
    %v323 = vpack.c.bf16 %v309, %v305
    %v324 = vpack.c.bf16 %v319, %v315
    %v333 = vunpack.c.l.b16 %v132
    %v334 = vunpack.c.l.b16 %v133
    %v335 = vunpack.c.l.b16 %v134
    %v336 = vunpack.c.l.b16 %v135
    %v337 = vunpack.c.l.b16 %v136
    %v338 = vunpack.c.l.b16 %v137
    %v339 = vunpack.c.l.b16 %v138
    %v340 = vunpack.c.l.b16 %v139
    %v341 = vpack.c.b16 %v334, %v333
    %v342 = vpack.c.b16 %v336, %v335
    %v343 = vpack.c.b16 %v338, %v337
    %v344 = vpack.c.b16 %v340, %v339
    %vm345 = vcmask 523264
    %v347 = vsel %vm345, %v341, 0
    %v350 = vsel %vm345, %v342, 0
    %v353 = vsel %vm345, %v343, 0
    %v356 = vsel %vm345, %v344, 0
    %358 = vmatprep.subr.bf16.mxu0 0
    %359 = vmatpush1.bf16.msra.mxu0 %v321
    %360 = vmatprep.subr.bf16.mxu0 0
    %361 = vmatpush1.bf16.msra.mxu0 %v322
    %362 = vmatprep.subr.bf16.mxu0 0
    %363 = vmatpush1.bf16.msra.mxu0 %v323
    %364 = vmatprep.subr.bf16.mxu0 0
    %365 = vmatpush1.bf16.msra.mxu0 %v324
    %366 = vmatprep.subr.bf16.mxu0 0
    %367 = vmatpush1.bf16.msra.mxu0 0
    %368 = vmatprep.subr.bf16.mxu0 0
    %369 = vmatpush1.bf16.msra.mxu0 0
    %370 = vmatprep.subr.bf16.mxu0 0
    %371 = vmatpush1.bf16.msra.mxu0 0
    %372 = vmatprep.subr.bf16.mxu0 0
    %373 = vmatpush1.bf16.msra.mxu0 0
    %374 = vmatprep.subr.bf16.mxu0 0
    %375 = vmatpush1.bf16.msra.mxu0 0
    %376 = vmatprep.subr.bf16.mxu0 0
    %377 = vmatpush1.bf16.msra.mxu0 0
    %378 = vmatprep.subr.bf16.mxu0 0
    %379 = vmatpush1.bf16.msra.mxu0 0
    %380 = vmatprep.subr.bf16.mxu0 0
    %381 = vmatpush1.bf16.msra.mxu0 0
    %382 = vmatprep.subr.bf16.mxu0 0
    %383 = vmatpush1.bf16.msra.mxu0 0
    %384 = vmatprep.subr.bf16.mxu0 0
    %385 = vmatpush1.bf16.msra.mxu0 0
    %386 = vmatprep.subr.bf16.mxu0 0
    %387 = vmatpush1.bf16.msra.mxu0 0
    %388 = vmatprep.subr.bf16.mxu0 0
    %389 = vmatpush1.bf16.msra.mxu0 0
    %390 = vmatprep.mubr.bf16.mxu0 0
    %391 = vmatmul.mubr.bf16.gmra.mrb[0].mxu0 %v347
    %v392 = vpop.f32.mrb[0].mxu0
    %v393 = vadd.f32 0.0, %v392
    %v394 = vpop.f32.mrb[0].mxu0
    %v395 = vpop.f32.mrb[0].mxu0
    %v396 = vadd.f32 0.0, %v395
    %v397 = vpop.f32.mrb[0].mxu0
    %398 = vmatprep.mubr.bf16.mxu0 0
    %399 = vmatmul.mubr.bf16.gmra.mrb[0].mxu0 %v350
    %v400 = vpop.f32.mrb[0].mxu0
    %v401 = vadd.f32 0.0, %v400
    %v402 = vpop.f32.mrb[0].mxu0
    %v403 = vpop.f32.mrb[0].mxu0
    %v404 = vadd.f32 0.0, %v403
    %v405 = vpop.f32.mrb[0].mxu0
    %406 = vmatprep.mubr.bf16.mxu0 0
    %407 = vmatmul.mubr.bf16.gmra.mrb[0].mxu0 %v353
    %v408 = vpop.f32.mrb[0].mxu0
    %v409 = vadd.f32 0.0, %v408
    %v410 = vpop.f32.mrb[0].mxu0
    %v411 = vpop.f32.mrb[0].mxu0
    %v412 = vadd.f32 0.0, %v411
    %v413 = vpop.f32.mrb[0].mxu0
    %414 = vmatprep.mubr.bf16.mxu0 0
    %415 = vmatmul.mubr.bf16.gmra.mrb[0].mxu0 %v356
    %v416 = vpop.f32.mrb[0].mxu0
    %v417 = vadd.f32 0.0, %v416
    %v418 = vpop.f32.mrb[0].mxu0
    %v419 = vpop.f32.mrb[0].mxu0
    %v420 = vadd.f32 0.0, %v419
    %v421 = vpop.f32.mrb[0].mxu0
    %422 = vdwg.mxu0
    %v423 = vadd.f32 %v283, %v393
    %v424 = vadd.f32 %v287, %v396
    %v425 = vadd.f32 %v293, %v401
    %v426 = vadd.f32 %v297, %v404
    %v427 = vadd.f32 %v303, %v409
    %v428 = vadd.f32 %v307, %v412
    %v429 = vadd.f32 %v313, %v417
    %v430 = vadd.f32 %v317, %v420
    %v431 = vld [vmem:[%s3] sm:$0x1]
    %v433 = vlaneseq
    %v434 = vshrl.u32 %v433, 7
    %v435 = vsub.s32 0, %v434
    %v436 = vrot.slane %v431, %v435
    %v438 = vadd.f32 %v423, %v436
    %v439 = vadd.f32 %v424, %v436
    %v440 = vadd.f32 %v425, %v436
    %v441 = vadd.f32 %v426, %v436
    %v442 = vadd.f32 %v427, %v436
    %v443 = vadd.f32 %v428, %v436
    %v444 = vadd.f32 %v429, %v436
    %v445 = vadd.f32 %v430, %v436
    %v446 = vmax.f32 %v438, 0.0
    %v447 = vmax.f32 %v439, 0.0
    %v448 = vmax.f32 %v440, 0.0
    %v449 = vmax.f32 %v441, 0.0
    %v450 = vmax.f32 %v442, 0.0
    %v451 = vmax.f32 %v443, 0.0
    %v452 = vmax.f32 %v444, 0.0
    %v453 = vmax.f32 %v445, 0.0
    %v454 = vld [vmem:[#allocation11] sm:$0xff]
    %v455 = vld [vmem:[#allocation11 + $0x8] sm:$0xff]
    %v456 = vld [vmem:[#allocation11 + $0x10] sm:$0xff]
    %v457 = vld [vmem:[#allocation11 + $0x18] sm:$0xff]
    %v458 = vld [vmem:[#allocation11 + $0x20] sm:$0xff]
    %v459 = vld [vmem:[#allocation11 + $0x28] sm:$0xff]
    %v460 = vld [vmem:[#allocation11 + $0x30] sm:$0xff]
    %v461 = vld [vmem:[#allocation11 + $0x38] sm:$0xff]
    %vm462 = vcmp.ge.f32.partialorder %v454, 0.5
    %vm463 = vcmp.ge.f32.partialorder %v455, 0.5
    %vm464 = vcmp.ge.f32.partialorder %v456, 0.5
    %vm465 = vcmp.ge.f32.partialorder %v457, 0.5
    %vm466 = vcmp.ge.f32.partialorder %v458, 0.5
    %vm467 = vcmp.ge.f32.partialorder %v459, 0.5
    %vm468 = vcmp.ge.f32.partialorder %v460, 0.5
    %vm469 = vcmp.ge.f32.partialorder %v461, 0.5
    %v470 = vmul.f32 %v446, 2.0
    %v471 = vmul.f32 %v447, 2.0
    %v472 = vmul.f32 %v448, 2.0
    %v473 = vmul.f32 %v449, 2.0
    %v474 = vmul.f32 %v450, 2.0
    %v475 = vmul.f32 %v451, 2.0
    %v476 = vmul.f32 %v452, 2.0
    %v477 = vmul.f32 %v453, 2.0
    %v478 = vsel %vm462, %v470, 0.0
    %v479 = vsel %vm463, %v471, 0.0
    %v480 = vsel %vm464, %v472, 0.0
    %v481 = vsel %vm465, %v473, 0.0
    %v482 = vsel %vm466, %v474, 0.0
    %v483 = vsel %vm467, %v475, 0.0
    %v484 = vsel %vm468, %v476, 0.0
    %v485 = vsel %vm469, %v477, 0.0
    %v486 = vpack.c.bf16 %v479, %v478
    %v487 = vpack.c.bf16 %v481, %v480
    %v488 = vpack.c.bf16 %v483, %v482
    %v489 = vpack.c.bf16 %v485, %v484
    %v490 = vld [vmem:[#allocation8] sm:$0xff]
    %v491 = vld [vmem:[#allocation8 + $0x8] sm:$0xff]
    %v492 = vld [vmem:[#allocation8 + $0x10] sm:$0xff]
    %v493 = vld [vmem:[#allocation8 + $0x18] sm:$0xff]
    %v494 = vld [vmem:[#allocation8 + $0x20] sm:$0xff]
    %v495 = vld [vmem:[#allocation8 + $0x28] sm:$0xff]
    %v496 = vld [vmem:[#allocation8 + $0x30] sm:$0xff]
    %v497 = vld [vmem:[#allocation8 + $0x38] sm:$0xff]
    %v498 = vld [vmem:[#allocation8 + $0x40] sm:$0xff]
    %v499 = vld [vmem:[#allocation8 + $0x48] sm:$0xff]
    %v500 = vld [vmem:[#allocation8 + $0x50] sm:$0xff]
    %v501 = vld [vmem:[#allocation8 + $0x58] sm:$0xff]
    %v502 = vld [vmem:[#allocation8 + $0x60] sm:$0xff]
    %v503 = vld [vmem:[#allocation8 + $0x68] sm:$0xff]
    %v504 = vld [vmem:[#allocation8 + $0x70] sm:$0xff]
    %v505 = vld [vmem:[#allocation8 + $0x78] sm:$0xff]
    %v522 = vunpack.c.l.b16 %v490
    %v523 = vunpack.c.h.b16 %v490
    %v524 = vunpack.c.l.b16 %v491
    %v525 = vunpack.c.h.b16 %v491
    %v526 = vunpack.c.l.b16 %v492
    %v527 = vunpack.c.h.b16 %v492
    %v528 = vunpack.c.l.b16 %v493
    %v529 = vunpack.c.h.b16 %v493
    %v530 = vunpack.c.l.b16 %v494
    %v531 = vunpack.c.h.b16 %v494
    %v532 = vunpack.c.l.b16 %v495
    %v533 = vunpack.c.h.b16 %v495
    %v534 = vunpack.c.l.b16 %v496
    %v535 = vunpack.c.h.b16 %v496
    %v536 = vunpack.c.l.b16 %v497
    %v537 = vunpack.c.h.b16 %v497
    %v538 = vunpack.c.l.b16 %v498
    %v539 = vunpack.c.h.b16 %v498
    %v540 = vunpack.c.l.b16 %v499
    %v541 = vunpack.c.h.b16 %v499
    %v542 = vunpack.c.l.b16 %v500
    %v543 = vunpack.c.h.b16 %v500
    %v544 = vunpack.c.l.b16 %v501
    %v545 = vunpack.c.h.b16 %v501
    %v546 = vunpack.c.l.b16 %v502
    %v547 = vunpack.c.h.b16 %v502
    %v548 = vunpack.c.l.b16 %v503
    %v549 = vunpack.c.h.b16 %v503
    %v550 = vunpack.c.l.b16 %v504
    %v551 = vunpack.c.h.b16 %v504
    %v552 = vunpack.c.l.b16 %v505
    %v553 = vunpack.c.h.b16 %v505
    %v554 = vpack.c.b16 %v524, %v522
    %v555 = vpack.c.b16 %v525, %v523
    %v556 = vpack.c.b16 %v528, %v526
    %v557 = vpack.c.b16 %v529, %v527
    %v558 = vpack.c.b16 %v532, %v530
    %v559 = vpack.c.b16 %v533, %v531
    %v560 = vpack.c.b16 %v536, %v534
    %v561 = vpack.c.b16 %v537, %v535
    %v562 = vpack.c.b16 %v540, %v538
    %v563 = vpack.c.b16 %v541, %v539
    %v564 = vpack.c.b16 %v544, %v542
    %v565 = vpack.c.b16 %v545, %v543
    %v566 = vpack.c.b16 %v548, %v546
    %v567 = vpack.c.b16 %v549, %v547
    %v568 = vpack.c.b16 %v552, %v550
    %v569 = vpack.c.b16 %v553, %v551
    %586 = vmatprep.subr.bf16.mxu0 %v555
    %587 = vmatpush1.bf16.msra.mxu0 %v554
    %588 = vmatprep.subr.bf16.mxu0 %v557
    %589 = vmatpush1.bf16.msra.mxu0 %v556
    %590 = vmatprep.subr.bf16.mxu0 %v559
    %591 = vmatpush1.bf16.msra.mxu0 %v558
    %592 = vmatprep.subr.bf16.mxu0 %v561
    %593 = vmatpush1.bf16.msra.mxu0 %v560
    %594 = vmatprep.subr.bf16.mxu0 %v563
    %595 = vmatpush1.bf16.msra.mxu0 %v562
    %596 = vmatprep.subr.bf16.mxu0 %v565
    %597 = vmatpush1.bf16.msra.mxu0 %v564
    %598 = vmatprep.subr.bf16.mxu0 %v567
    %599 = vmatpush1.bf16.msra.mxu0 %v566
    %600 = vmatprep.subr.bf16.mxu0 %v569
    %601 = vmatpush1.bf16.msra.mxu0 %v568
    %602 = vmatprep.subr.bf16.mxu0 0
    %603 = vmatpush1.bf16.msra.mxu0 0
    %604 = vmatprep.subr.bf16.mxu0 0
    %605 = vmatpush1.bf16.msra.mxu0 0
    %606 = vmatprep.subr.bf16.mxu0 0
    %607 = vmatpush1.bf16.msra.mxu0 0
    %608 = vmatprep.subr.bf16.mxu0 0
    %609 = vmatpush1.bf16.msra.mxu0 0
    %610 = vmatprep.subr.bf16.mxu0 0
    %611 = vmatpush1.bf16.msra.mxu0 0
    %612 = vmatprep.subr.bf16.mxu0 0
    %613 = vmatpush1.bf16.msra.mxu0 0
    %614 = vmatprep.subr.bf16.mxu0 0
    %615 = vmatpush1.bf16.msra.mxu0 0
    %616 = vmatprep.subr.bf16.mxu0 0
    %617 = vmatpush1.bf16.msra.mxu0 0
    %618 = vmatprep.mubr.bf16.mxu0 0
    %619 = vmatmul.mubr.bf16.gmra.mrb[0].mxu0 %v486
    %v620 = vpop.f32.mrb[0].mxu0
    %v621 = vadd.f32 0.0, %v620
    %v622 = vpop.f32.mrb[0].mxu0
    %v623 = vadd.f32 0.0, %v622
    %v624 = vpop.f32.mrb[0].mxu0
    %v625 = vadd.f32 0.0, %v624
    %v626 = vpop.f32.mrb[0].mxu0
    %v627 = vadd.f32 0.0, %v626
    %628 = vmatprep.mubr.bf16.mxu0 0
    %629 = vmatmul.mubr.bf16.gmra.mrb[0].mxu0 %v487
    %v630 = vpop.f32.mrb[0].mxu0
    %v631 = vadd.f32 0.0, %v630
    %v632 = vpop.f32.mrb[0].mxu0
    %v633 = vadd.f32 0.0, %v632
    %v634 = vpop.f32.mrb[0].mxu0
    %v635 = vadd.f32 0.0, %v634
    %v636 = vpop.f32.mrb[0].mxu0
    %v637 = vadd.f32 0.0, %v636
    %638 = vmatprep.mubr.bf16.mxu0 0
    %639 = vmatmul.mubr.bf16.gmra.mrb[0].mxu0 %v488
    %v640 = vpop.f32.mrb[0].mxu0
    %v641 = vadd.f32 0.0, %v640
    %v642 = vpop.f32.mrb[0].mxu0
    %v643 = vadd.f32 0.0, %v642
    %v644 = vpop.f32.mrb[0].mxu0
    %v645 = vadd.f32 0.0, %v644
    %v646 = vpop.f32.mrb[0].mxu0
    %v647 = vadd.f32 0.0, %v646
    %648 = vmatprep.mubr.bf16.mxu0 0
    %649 = vmatmul.mubr.bf16.gmra.mrb[0].mxu0 %v489
    %v650 = vpop.f32.mrb[0].mxu0
    %v651 = vadd.f32 0.0, %v650
    %v652 = vpop.f32.mrb[0].mxu0
    %v653 = vadd.f32 0.0, %v652
    %v654 = vpop.f32.mrb[0].mxu0
    %v655 = vadd.f32 0.0, %v654
    %v656 = vpop.f32.mrb[0].mxu0
    %v657 = vadd.f32 0.0, %v656
    %658 = vdwg.mxu0
    %v659 = vpack.c.bf16 %v627, %v623
    %v660 = vpack.c.bf16 %v637, %v633
    %v661 = vpack.c.bf16 %v647, %v643
    %v662 = vpack.c.bf16 %v657, %v653
    %663 = vmatprep.subr.bf16.mxu0 0
    %664 = vmatpush1.bf16.msra.mxu0 %v659
    %665 = vmatprep.subr.bf16.mxu0 0
    %666 = vmatpush1.bf16.msra.mxu0 %v660
    %667 = vmatprep.subr.bf16.mxu0 0
    %668 = vmatpush1.bf16.msra.mxu0 %v661
    %669 = vmatprep.subr.bf16.mxu0 0
    %670 = vmatpush1.bf16.msra.mxu0 %v662
    %671 = vmatprep.subr.bf16.mxu0 0
    %672 = vmatpush1.bf16.msra.mxu0 0
    %673 = vmatprep.subr.bf16.mxu0 0
    %674 = vmatpush1.bf16.msra.mxu0 0
    %675 = vmatprep.subr.bf16.mxu0 0
    %676 = vmatpush1.bf16.msra.mxu0 0
    %677 = vmatprep.subr.bf16.mxu0 0
    %678 = vmatpush1.bf16.msra.mxu0 0
    %679 = vmatprep.subr.bf16.mxu0 0
    %680 = vmatpush1.bf16.msra.mxu0 0
    %681 = vmatprep.subr.bf16.mxu0 0
    %682 = vmatpush1.bf16.msra.mxu0 0
    %683 = vmatprep.subr.bf16.mxu0 0
    %684 = vmatpush1.bf16.msra.mxu0 0
    %685 = vmatprep.subr.bf16.mxu0 0
    %686 = vmatpush1.bf16.msra.mxu0 0
    %687 = vmatprep.subr.bf16.mxu0 0
    %688 = vmatpush1.bf16.msra.mxu0 0
    %689 = vmatprep.subr.bf16.mxu0 0
    %690 = vmatpush1.bf16.msra.mxu0 0
    %691 = vmatprep.subr.bf16.mxu0 0
    %692 = vmatpush1.bf16.msra.mxu0 0
    %693 = vmatprep.subr.bf16.mxu0 0
    %694 = vmatpush1.bf16.msra.mxu0 0
    %695 = vmatprep.mubr.bf16.mxu0 0
    %696 = vmatmul.mubr.bf16.gmra.mrb[0].mxu0 %v347
    %v697 = vpop.f32.mrb[0].mxu0
    %v698 = vadd.f32 0.0, %v697
    %v699 = vpop.f32.mrb[0].mxu0
    %v700 = vpop.f32.mrb[0].mxu0
    %v701 = vadd.f32 0.0, %v700
    %v702 = vpop.f32.mrb[0].mxu0
    %703 = vmatprep.mubr.bf16.mxu0 0
    %704 = vmatmul.mubr.bf16.gmra.mrb[0].mxu0 %v350
    %v705 = vpop.f32.mrb[0].mxu0
    %v706 = vadd.f32 0.0, %v705
    %v707 = vpop.f32.mrb[0].mxu0
    %v708 = vpop.f32.mrb[0].mxu0
    %v709 = vadd.f32 0.0, %v708
    %v710 = vpop.f32.mrb[0].mxu0
    %711 = vmatprep.mubr.bf16.mxu0 0
    %712 = vmatmul.mubr.bf16.gmra.mrb[0].mxu0 %v353
    %v713 = vpop.f32.mrb[0].mxu0
    %v714 = vadd.f32 0.0, %v713
    %v715 = vpop.f32.mrb[0].mxu0
    %v716 = vpop.f32.mrb[0].mxu0
    %v717 = vadd.f32 0.0, %v716
    %v718 = vpop.f32.mrb[0].mxu0
    %719 = vmatprep.mubr.bf16.mxu0 0
    %720 = vmatmul.mubr.bf16.gmra.mrb[0].mxu0 %v356
    %v721 = vpop.f32.mrb[0].mxu0
    %v722 = vadd.f32 0.0, %v721
    %v723 = vpop.f32.mrb[0].mxu0
    %v724 = vpop.f32.mrb[0].mxu0
    %v725 = vadd.f32 0.0, %v724
    %v726 = vpop.f32.mrb[0].mxu0
    %727 = vdwg.mxu0
    %v728 = vadd.f32 %v621, %v698
    %v729 = vadd.f32 %v625, %v701
    %v730 = vadd.f32 %v631, %v706
    %v731 = vadd.f32 %v635, %v709
    %v732 = vadd.f32 %v641, %v714
    %v733 = vadd.f32 %v645, %v717
    %v734 = vadd.f32 %v651, %v722
    %v735 = vadd.f32 %v655, %v725
    %v736 = vld [vmem:[%s5] sm:$0x1]
    %v738 = vlaneseq
    %v739 = vshrl.u32 %v738, 7
    %v740 = vsub.s32 0, %v739
    %v741 = vrot.slane %v736, %v740
    %v743 = vadd.f32 %v728, %v741
    %v744 = vadd.f32 %v729, %v741
    %v745 = vadd.f32 %v730, %v741
    %v746 = vadd.f32 %v731, %v741
    %v747 = vadd.f32 %v732, %v741
    %v748 = vadd.f32 %v733, %v741
    %v749 = vadd.f32 %v734, %v741
    %v750 = vadd.f32 %v735, %v741
    %v751 = vmax.f32 %v743, 0.0
    %v752 = vmax.f32 %v744, 0.0
    %v753 = vmax.f32 %v745, 0.0
    %v754 = vmax.f32 %v746, 0.0
    %v755 = vmax.f32 %v747, 0.0
    %v756 = vmax.f32 %v748, 0.0
    %v757 = vmax.f32 %v749, 0.0
    %v758 = vmax.f32 %v750, 0.0
    %v759 = vld [vmem:[#allocation13] sm:$0xff]
    %v760 = vld [vmem:[#allocation13 + $0x8] sm:$0xff]
    %v761 = vld [vmem:[#allocation13 + $0x10] sm:$0xff]
    %v762 = vld [vmem:[#allocation13 + $0x18] sm:$0xff]
    %v763 = vld [vmem:[#allocation13 + $0x20] sm:$0xff]
    %v764 = vld [vmem:[#allocation13 + $0x28] sm:$0xff]
    %v765 = vld [vmem:[#allocation13 + $0x30] sm:$0xff]
    %v766 = vld [vmem:[#allocation13 + $0x38] sm:$0xff]
    %vm767 = vcmp.ge.f32.partialorder %v759, 0.5
    %vm768 = vcmp.ge.f32.partialorder %v760, 0.5
    %vm769 = vcmp.ge.f32.partialorder %v761, 0.5
    %vm770 = vcmp.ge.f32.partialorder %v762, 0.5
    %vm771 = vcmp.ge.f32.partialorder %v763, 0.5
    %vm772 = vcmp.ge.f32.partialorder %v764, 0.5
    %vm773 = vcmp.ge.f32.partialorder %v765, 0.5
    %vm774 = vcmp.ge.f32.partialorder %v766, 0.5
    %v775 = vmul.f32 %v751, 2.0
    %v776 = vmul.f32 %v752, 2.0
    %v777 = vmul.f32 %v753, 2.0
    %v778 = vmul.f32 %v754, 2.0
    %v779 = vmul.f32 %v755, 2.0
    %v780 = vmul.f32 %v756, 2.0
    %v781 = vmul.f32 %v757, 2.0
    %v782 = vmul.f32 %v758, 2.0
    %v783 = vsel %vm767, %v775, 0.0
    %v784 = vsel %vm768, %v776, 0.0
    %v785 = vsel %vm769, %v777, 0.0
    %v786 = vsel %vm770, %v778, 0.0
    %v787 = vsel %vm771, %v779, 0.0
    %v788 = vsel %vm772, %v780, 0.0
    %v789 = vsel %vm773, %v781, 0.0
    %v790 = vsel %vm774, %v782, 0.0
    %v791 = vpack.c.bf16 %v784, %v783
    %v792 = vpack.c.bf16 %v786, %v785
    %v793 = vpack.c.bf16 %v788, %v787
    %v794 = vpack.c.bf16 %v790, %v789
    %v795 = vld [vmem:[#allocation10] sm:$0xff]
    %v796 = vld [vmem:[#allocation10 + $0x8] sm:$0xff]
    %v797 = vld [vmem:[#allocation10 + $0x10] sm:$0xff]
    %v798 = vld [vmem:[#allocation10 + $0x18] sm:$0xff]
    %v799 = vld [vmem:[#allocation10 + $0x20] sm:$0xff]
    %v800 = vld [vmem:[#allocation10 + $0x28] sm:$0xff]
    %v801 = vld [vmem:[#allocation10 + $0x30] sm:$0xff]
    %v802 = vld [vmem:[#allocation10 + $0x38] sm:$0xff]
    %v803 = vld [vmem:[#allocation10 + $0x40] sm:$0xff]
    %v804 = vld [vmem:[#allocation10 + $0x48] sm:$0xff]
    %v805 = vld [vmem:[#allocation10 + $0x50] sm:$0xff]
    %v806 = vld [vmem:[#allocation10 + $0x58] sm:$0xff]
    %v807 = vld [vmem:[#allocation10 + $0x60] sm:$0xff]
    %v808 = vld [vmem:[#allocation10 + $0x68] sm:$0xff]
    %v809 = vld [vmem:[#allocation10 + $0x70] sm:$0xff]
    %v810 = vld [vmem:[#allocation10 + $0x78] sm:$0xff]
    %v827 = vunpack.c.l.b16 %v795
    %v828 = vunpack.c.h.b16 %v795
    %v829 = vunpack.c.l.b16 %v796
    %v830 = vunpack.c.h.b16 %v796
    %v831 = vunpack.c.l.b16 %v797
    %v832 = vunpack.c.h.b16 %v797
    %v833 = vunpack.c.l.b16 %v798
    %v834 = vunpack.c.h.b16 %v798
    %v835 = vunpack.c.l.b16 %v799
    %v836 = vunpack.c.h.b16 %v799
    %v837 = vunpack.c.l.b16 %v800
    %v838 = vunpack.c.h.b16 %v800
    %v839 = vunpack.c.l.b16 %v801
    %v840 = vunpack.c.h.b16 %v801
    %v841 = vunpack.c.l.b16 %v802
    %v842 = vunpack.c.h.b16 %v802
    %v843 = vunpack.c.l.b16 %v803
    %v844 = vunpack.c.h.b16 %v803
    %v845 = vunpack.c.l.b16 %v804
    %v846 = vunpack.c.h.b16 %v804
    %v847 = vunpack.c.l.b16 %v805
    %v848 = vunpack.c.h.b16 %v805
    %v849 = vunpack.c.l.b16 %v806
    %v850 = vunpack.c.h.b16 %v806
    %v851 = vunpack.c.l.b16 %v807
    %v852 = vunpack.c.h.b16 %v807
    %v853 = vunpack.c.l.b16 %v808
    %v854 = vunpack.c.h.b16 %v808
    %v855 = vunpack.c.l.b16 %v809
    %v856 = vunpack.c.h.b16 %v809
    %v857 = vunpack.c.l.b16 %v810
    %v858 = vunpack.c.h.b16 %v810
    %v859 = vpack.c.b16 %v829, %v827
    %v860 = vpack.c.b16 %v830, %v828
    %v861 = vpack.c.b16 %v833, %v831
    %v862 = vpack.c.b16 %v834, %v832
    %v863 = vpack.c.b16 %v837, %v835
    %v864 = vpack.c.b16 %v838, %v836
    %v865 = vpack.c.b16 %v841, %v839
    %v866 = vpack.c.b16 %v842, %v840
    %v867 = vpack.c.b16 %v845, %v843
    %v868 = vpack.c.b16 %v846, %v844
    %v869 = vpack.c.b16 %v849, %v847
    %v870 = vpack.c.b16 %v850, %v848
    %v871 = vpack.c.b16 %v853, %v851
    %v872 = vpack.c.b16 %v854, %v852
    %v873 = vpack.c.b16 %v857, %v855
    %v874 = vpack.c.b16 %v858, %v856
    %891 = vmatprep.subr.bf16.mxu0 %v860
    %892 = vmatpush1.bf16.msra.mxu0 %v859
    %893 = vmatprep.subr.bf16.mxu0 %v862
    %894 = vmatpush1.bf16.msra.mxu0 %v861
    %895 = vmatprep.subr.bf16.mxu0 %v864
    %896 = vmatpush1.bf16.msra.mxu0 %v863
    %897 = vmatprep.subr.bf16.mxu0 %v866
    %898 = vmatpush1.bf16.msra.mxu0 %v865
    %899 = vmatprep.subr.bf16.mxu0 %v868
    %900 = vmatpush1.bf16.msra.mxu0 %v867
    %901 = vmatprep.subr.bf16.mxu0 %v870
    %902 = vmatpush1.bf16.msra.mxu0 %v869
    %903 = vmatprep.subr.bf16.mxu0 %v872
    %904 = vmatpush1.bf16.msra.mxu0 %v871
    %905 = vmatprep.subr.bf16.mxu0 %v874
    %906 = vmatpush1.bf16.msra.mxu0 %v873
    %907 = vmatprep.subr.bf16.mxu0 0
    %908 = vmatpush1.bf16.msra.mxu0 0
    %909 = vmatprep.subr.bf16.mxu0 0
    %910 = vmatpush1.bf16.msra.mxu0 0
    %911 = vmatprep.subr.bf16.mxu0 0
    %912 = vmatpush1.bf16.msra.mxu0 0
    %913 = vmatprep.subr.bf16.mxu0 0
    %914 = vmatpush1.bf16.msra.mxu0 0
    %915 = vmatprep.subr.bf16.mxu0 0
    %916 = vmatpush1.bf16.msra.mxu0 0
    %917 = vmatprep.subr.bf16.mxu0 0
    %918 = vmatpush1.bf16.msra.mxu0 0
    %919 = vmatprep.subr.bf16.mxu0 0
    %920 = vmatpush1.bf16.msra.mxu0 0
    %921 = vmatprep.subr.bf16.mxu0 0
    %922 = vmatpush1.bf16.msra.mxu0 0
    %923 = vmatprep.mubr.bf16.mxu0 0
    %924 = vmatmul.mubr.bf16.gmra.mrb[0].mxu0 %v791
    %v925 = vpop.f32.mrb[0].mxu0
    %v926 = vadd.f32 0.0, %v925
    %v927 = vpop.f32.mrb[0].mxu0
    %v928 = vadd.f32 0.0, %v927
    %v929 = vpop.f32.mrb[0].mxu0
    %v930 = vadd.f32 0.0, %v929
    %v931 = vpop.f32.mrb[0].mxu0
    %v932 = vadd.f32 0.0, %v931
    %933 = vmatprep.mubr.bf16.mxu0 0
    %934 = vmatmul.mubr.bf16.gmra.mrb[0].mxu0 %v792
    %v935 = vpop.f32.mrb[0].mxu0
    %v936 = vadd.f32 0.0, %v935
    %v937 = vpop.f32.mrb[0].mxu0
    %v938 = vadd.f32 0.0, %v937
    %v939 = vpop.f32.mrb[0].mxu0
    %v940 = vadd.f32 0.0, %v939
    %v941 = vpop.f32.mrb[0].mxu0
    %v942 = vadd.f32 0.0, %v941
    %943 = vmatprep.mubr.bf16.mxu0 0
    %944 = vmatmul.mubr.bf16.gmra.mrb[0].mxu0 %v793
    %v945 = vpop.f32.mrb[0].mxu0
    %v946 = vadd.f32 0.0, %v945
    %v947 = vpop.f32.mrb[0].mxu0
    %v948 = vadd.f32 0.0, %v947
    %v949 = vpop.f32.mrb[0].mxu0
    %v950 = vadd.f32 0.0, %v949
    %v951 = vpop.f32.mrb[0].mxu0
    %v952 = vadd.f32 0.0, %v951
    %953 = vmatprep.mubr.bf16.mxu0 0
    %954 = vmatmul.mubr.bf16.gmra.mrb[0].mxu0 %v794
    %v955 = vpop.f32.mrb[0].mxu0
    %v956 = vadd.f32 0.0, %v955
    %v957 = vpop.f32.mrb[0].mxu0
    %v958 = vadd.f32 0.0, %v957
    %v959 = vpop.f32.mrb[0].mxu0
    %v960 = vadd.f32 0.0, %v959
    %v961 = vpop.f32.mrb[0].mxu0
    %v962 = vadd.f32 0.0, %v961
    %963 = vdwg.mxu0
    %v964 = vpack.c.bf16 %v932, %v928
    %v965 = vpack.c.bf16 %v942, %v938
    %v966 = vpack.c.bf16 %v952, %v948
    %v967 = vpack.c.bf16 %v962, %v958
    %968 = vmatprep.subr.bf16.mxu0 0
    %969 = vmatpush1.bf16.msra.mxu0 %v964
    %970 = vmatprep.subr.bf16.mxu0 0
    %971 = vmatpush1.bf16.msra.mxu0 %v965
    %972 = vmatprep.subr.bf16.mxu0 0
    %973 = vmatpush1.bf16.msra.mxu0 %v966
    %974 = vmatprep.subr.bf16.mxu0 0
    %975 = vmatpush1.bf16.msra.mxu0 %v967
    %976 = vmatprep.subr.bf16.mxu0 0
    %977 = vmatpush1.bf16.msra.mxu0 0
    %978 = vmatprep.subr.bf16.mxu0 0
    %979 = vmatpush1.bf16.msra.mxu0 0
    %980 = vmatprep.subr.bf16.mxu0 0
    %981 = vmatpush1.bf16.msra.mxu0 0
    %982 = vmatprep.subr.bf16.mxu0 0
    %983 = vmatpush1.bf16.msra.mxu0 0
    %984 = vmatprep.subr.bf16.mxu0 0
    %985 = vmatpush1.bf16.msra.mxu0 0
    %986 = vmatprep.subr.bf16.mxu0 0
    %987 = vmatpush1.bf16.msra.mxu0 0
    %988 = vmatprep.subr.bf16.mxu0 0
    %989 = vmatpush1.bf16.msra.mxu0 0
    %990 = vmatprep.subr.bf16.mxu0 0
    %991 = vmatpush1.bf16.msra.mxu0 0
    %992 = vmatprep.subr.bf16.mxu0 0
    %993 = vmatpush1.bf16.msra.mxu0 0
    %994 = vmatprep.subr.bf16.mxu0 0
    %995 = vmatpush1.bf16.msra.mxu0 0
    %996 = vmatprep.subr.bf16.mxu0 0
    %997 = vmatpush1.bf16.msra.mxu0 0
    %998 = vmatprep.subr.bf16.mxu0 0
    %999 = vmatpush1.bf16.msra.mxu0 0
    %1000 = vmatprep.mubr.bf16.mxu0 0
    %1001 = vmatmul.mubr.bf16.gmra.mrb[0].mxu0 %v347
    %v1002 = vpop.f32.mrb[0].mxu0
    %v1003 = vadd.f32 0.0, %v1002
    %v1004 = vpop.f32.mrb[0].mxu0
    %v1005 = vpop.f32.mrb[0].mxu0
    %v1006 = vadd.f32 0.0, %v1005
    %v1007 = vpop.f32.mrb[0].mxu0
    %1008 = vmatprep.mubr.bf16.mxu0 0
    %1009 = vmatmul.mubr.bf16.gmra.mrb[0].mxu0 %v350
    %v1010 = vpop.f32.mrb[0].mxu0
    %v1011 = vadd.f32 0.0, %v1010
    %v1012 = vpop.f32.mrb[0].mxu0
    %v1013 = vpop.f32.mrb[0].mxu0
    %v1014 = vadd.f32 0.0, %v1013
    %v1015 = vpop.f32.mrb[0].mxu0
    %1016 = vmatprep.mubr.bf16.mxu0 0
    %1017 = vmatmul.mubr.bf16.gmra.mrb[0].mxu0 %v353
    %v1018 = vpop.f32.mrb[0].mxu0
    %v1019 = vadd.f32 0.0, %v1018
    %v1020 = vpop.f32.mrb[0].mxu0
    %v1021 = vpop.f32.mrb[0].mxu0
    %v1022 = vadd.f32 0.0, %v1021
    %v1023 = vpop.f32.mrb[0].mxu0
    %1024 = vmatprep.mubr.bf16.mxu0 0
    %1025 = vmatmul.mubr.bf16.gmra.mrb[0].mxu0 %v356
    %v1026 = vpop.f32.mrb[0].mxu0
    %v1027 = vadd.f32 0.0, %v1026
    %v1028 = vpop.f32.mrb[0].mxu0
    %v1029 = vpop.f32.mrb[0].mxu0
    %v1030 = vadd.f32 0.0, %v1029
    %v1031 = vpop.f32.mrb[0].mxu0
    %1032 = vdwg.mxu0
    %v1033 = vadd.f32 %v926, %v1003
    %v1034 = vadd.f32 %v930, %v1006
    %v1035 = vadd.f32 %v936, %v1011
    %v1036 = vadd.f32 %v940, %v1014
    %v1037 = vadd.f32 %v946, %v1019
    %v1038 = vadd.f32 %v950, %v1022
    %v1039 = vadd.f32 %v956, %v1027
    %v1040 = vadd.f32 %v960, %v1030
    %v1041 = vld [vmem:[%s7] sm:$0x1]
    %v1043 = vlaneseq
    %v1044 = vshrl.u32 %v1043, 7
    %v1045 = vsub.s32 0, %v1044
    %v1046 = vrot.slane %v1041, %v1045
    %v1048 = vadd.f32 %v1033, %v1046
    %v1049 = vadd.f32 %v1034, %v1046
    %v1050 = vadd.f32 %v1035, %v1046
    %v1051 = vadd.f32 %v1036, %v1046
    %v1052 = vadd.f32 %v1037, %v1046
    %v1053 = vadd.f32 %v1038, %v1046
    %v1054 = vadd.f32 %v1039, %v1046
    %v1055 = vadd.f32 %v1040, %v1046
    %1056 = vst [vmem:[#allocation14] sm:$0xff] %v1048
    %1057 = vst [vmem:[#allocation14 + $0x8] sm:$0xff] %v1049
    %1058 = vst [vmem:[#allocation14 + $0x10] sm:$0xff] %v1050
    %1059 = vst [vmem:[#allocation14 + $0x18] sm:$0xff] %v1051
    %1060 = vst [vmem:[#allocation14 + $0x20] sm:$0xff] %v1052
    %1061 = vst [vmem:[#allocation14 + $0x28] sm:$0xff] %v1053
    %1062 = vst [vmem:[#allocation14 + $0x30] sm:$0xff] %v1054
    %1063 = vst [vmem:[#allocation14 + $0x38] sm:$0xff] %v1055
    // Predicated region
    $region70: #{tpu_custom_call.1} parent=1 // pred_check
      _
    $region71: #{tpu_custom_call.1} parent=1 // pred_check_branch
      %1065 = sbr.rel (0) target = $region73
    $region72: #{tpu_custom_call.1} parent=1 // pred_region
      %s1067 = ssub.s32 1024, 1024
      %1068 = vsyncadd [#allocation4], %s1067
      %s1069 = sshll.u32 [#allocation14], 4
      %s1070 = int_to_ptr.vmem [resolvable:$true] %s1069
      %1075 = dma.vmem_to_hbm [thread:$0]  %s1070, 1024, %s10, [#allocation4], 128, 128, 8
    $region73: #{tpu_custom_call.1} parent=1 // pred_fallthru
      _
    // Predicated region
    $region74: #{tpu_custom_call.1} parent=1 // pred_check
      _
    $region75: #{tpu_custom_call.1} parent=1 // pred_check_branch
      %1077 = sbr.rel (0) target = $region77
    $region76: #{tpu_custom_call.1} parent=1 // pred_region
      %1078 = dma.done [#allocation4], 1024
    $region77: #{tpu_custom_call.1} parent=1 // pred_fallthru
      _
    %1079 = vsyncpa [#allocation3], 1
    %1080 = vsyncpa [#allocation6], 1
    %1081 = vsyncpa [#allocation9], 1
    %1082 = vsyncpa [#allocation12], 1
    %1083 = vsyncpa [#allocation4], 1

</llo_original>
